<compile_context>
chip_gen: v5e
topology: v5e:2x2
jax: 0.10.0
libtpu: 0.0.40
codegen_flags: <defaults>
</compile_context>

<pallas_src>
import jax
import jax.numpy as jnp
from jax.experimental import pallas as pl
from jax.experimental.pallas import tpu as pltpu


def _gather_kernel(ids_ref, table_ref, out_ref):
    # ids_ref:   SMEM (B_pad,) int32 row indices (scalar reads).
    # table_ref: VMEM (V, D) full embedding table (one DMA, single-buffered).
    # out_ref:   VMEM (B_pad, D) output slab (one full-tile store + one
    #            writeback DMA).
    B_pad = out_ref.shape[0]
    # Per-row dynamic (1, D) loads from the VMEM table (cheapest gather for
    # B << V), assembled into a single (B_pad, D) value so the output is
    # written with one unmasked aligned store instead of B masked row stores.
    rows = [table_ref[pl.ds(ids_ref[b], 1), :] for b in range(B_pad)]
    out_ref[...] = jnp.concatenate(rows, axis=0)


def int_conditioner_forward(ints, emb_table, *, min_val=0, max_val=512):
    """JAX/Pallas equivalent of IntConditioner.forward.

    Args:
      ints: 1-D int array (or python list) of shape (B,).
      emb_table: (max_val - min_val + 1, D) float embedding weight.
    Returns:
      [embeds (B, 1, D), ones (B, 1) float32]
    """
    ints = jnp.asarray(ints, dtype=jnp.int32)
    # Matches the PyTorch module: the clamped value is used directly as the
    # embedding index (no "- min_val" offset, faithful to the upstream code).
    clamped = jnp.clip(ints, min_val, max_val).astype(jnp.int32)

    B = ints.shape[0]
    V, D = emb_table.shape

    # Defensive clip so the in-kernel dynamic row read can never run past the
    # table (Pallas does not bounds-check VMEM reads).  No-op for the module's
    # intended configuration (min_val=0, max_val=V-1); PyTorch would raise on
    # a genuinely out-of-range index instead.
    idx = jnp.clip(clamped, 0, V - 1)

    # Pad the batch up to a multiple of 8 so the output block is (8k, 128)
    # sublane-aligned (unmasked full-tile stores, aligned writeback DMA).
    B_pad = int((B + 7) // 8 * 8)
    idx_padded = jnp.pad(idx, (0, B_pad - B))  # padded rows gather row 0, dropped below

    embeds_padded = pl.pallas_call(
        _gather_kernel,
        out_shape=jax.ShapeDtypeStruct((B_pad, D), emb_table.dtype),
        in_specs=[
            # Indices as scalars in SMEM.
            pl.BlockSpec(memory_space=pltpu.MemorySpace.SMEM),
            # Whole table resident in VMEM (513 x 128 f32 ~ 263 KiB,
            # single-buffered since there is no grid to pipeline).
            pl.BlockSpec(memory_space=pltpu.MemorySpace.VMEM),
        ],
        out_specs=pl.BlockSpec(memory_space=pltpu.MemorySpace.VMEM),
    )(idx_padded, emb_table)

    # Drop the padding rows and apply .unsqueeze(1).
    embeds = embeds_padded[:B].reshape(B, 1, D)
    # torch.ones(B, 1) — float32 by default, regardless of table dtype.
    mask = jnp.ones((B, 1), dtype=jnp.float32)
    return [embeds, mask]


if __name__ == "__main__":
    # Deterministic synthetic parameters:
    # nn.Embedding(max_val - min_val + 1, output_dim) with defaults.
    output_dim = 128
    min_val, max_val = 0, 512
    vocab = max_val - min_val + 1  # 513

    key = jax.random.PRNGKey(0)
    emb_table = jax.random.normal(key, (vocab, output_dim), dtype=jnp.float32)

    # Example ints (exercise the clamp on both sides).
    ints = jnp.array([3, 700, -5, 42], dtype=jnp.int32)

    embeds, mask = int_conditioner_forward(
        ints, emb_table, min_val=min_val, max_val=max_val
    )
    embeds = jax.block_until_ready(embeds)
    mask = jax.block_until_ready(mask)

    # Reference check against plain JAX (torch semantics: clamp then embed).
    ref = jnp.take(emb_table, jnp.clip(ints, min_val, max_val), axis=0)[:, None, :]
    assert embeds.shape == (ints.shape[0], 1, output_dim)
    assert mask.shape == (ints.shape[0], 1)
    assert mask.dtype == jnp.float32
    assert jnp.allclose(embeds, ref)
    assert jnp.allclose(mask, jnp.ones_like(mask))

    print("KERNEL_OK")
</pallas_src>

<mosaic_0001>
module attributes {stable_mosaic.version = 11 : i64} {
  func.func @_gather_kernel(%arg0: memref<8xi32, #tpu.memory_space<smem>>, %arg1: memref<513x128xf32, #tpu.memory_space<vmem>>, %arg2: memref<8x128xf32, #tpu.memory_space<vmem>>) attributes {dimension_semantics = [], scalar_prefetch = 0 : i64, scratch_operands = 0 : i64, tpu.core_type = #tpu.core_type<tc>} {
    %c0 = arith.constant 0 : index
    %0 = memref.load %arg0[%c0] : memref<8xi32, #tpu.memory_space<smem>>
    %1 = arith.index_cast %0 : i32 to index
    %c0_0 = arith.constant 0 : index
    %2 = vector.load %arg1[%1, %c0_0] : memref<513x128xf32, #tpu.memory_space<vmem>>, vector<1x128xf32>
    %c1 = arith.constant 1 : index
    %3 = memref.load %arg0[%c1] : memref<8xi32, #tpu.memory_space<smem>>
    %4 = arith.index_cast %3 : i32 to index
    %c0_1 = arith.constant 0 : index
    %5 = vector.load %arg1[%4, %c0_1] : memref<513x128xf32, #tpu.memory_space<vmem>>, vector<1x128xf32>
    %c2 = arith.constant 2 : index
    %6 = memref.load %arg0[%c2] : memref<8xi32, #tpu.memory_space<smem>>
    %7 = arith.index_cast %6 : i32 to index
    %c0_2 = arith.constant 0 : index
    %8 = vector.load %arg1[%7, %c0_2] : memref<513x128xf32, #tpu.memory_space<vmem>>, vector<1x128xf32>
    %c3 = arith.constant 3 : index
    %9 = memref.load %arg0[%c3] : memref<8xi32, #tpu.memory_space<smem>>
    %10 = arith.index_cast %9 : i32 to index
    %c0_3 = arith.constant 0 : index
    %11 = vector.load %arg1[%10, %c0_3] : memref<513x128xf32, #tpu.memory_space<vmem>>, vector<1x128xf32>
    %c4 = arith.constant 4 : index
    %12 = memref.load %arg0[%c4] : memref<8xi32, #tpu.memory_space<smem>>
    %13 = arith.index_cast %12 : i32 to index
    %c0_4 = arith.constant 0 : index
    %14 = vector.load %arg1[%13, %c0_4] : memref<513x128xf32, #tpu.memory_space<vmem>>, vector<1x128xf32>
    %c5 = arith.constant 5 : index
    %15 = memref.load %arg0[%c5] : memref<8xi32, #tpu.memory_space<smem>>
    %16 = arith.index_cast %15 : i32 to index
    %c0_5 = arith.constant 0 : index
    %17 = vector.load %arg1[%16, %c0_5] : memref<513x128xf32, #tpu.memory_space<vmem>>, vector<1x128xf32>
    %c6 = arith.constant 6 : index
    %18 = memref.load %arg0[%c6] : memref<8xi32, #tpu.memory_space<smem>>
    %19 = arith.index_cast %18 : i32 to index
    %c0_6 = arith.constant 0 : index
    %20 = vector.load %arg1[%19, %c0_6] : memref<513x128xf32, #tpu.memory_space<vmem>>, vector<1x128xf32>
    %c7 = arith.constant 7 : index
    %21 = memref.load %arg0[%c7] : memref<8xi32, #tpu.memory_space<smem>>
    %22 = arith.index_cast %21 : i32 to index
    %c0_7 = arith.constant 0 : index
    %23 = vector.load %arg1[%22, %c0_7] : memref<513x128xf32, #tpu.memory_space<vmem>>, vector<1x128xf32>
    %24 = tpu.concatenate %2, %5, %8, %11, %14, %17, %20, %23 in 0 : vector<1x128xf32>, vector<1x128xf32>, vector<1x128xf32>, vector<1x128xf32>, vector<1x128xf32>, vector<1x128xf32>, vector<1x128xf32>, vector<1x128xf32> -> vector<8x128xf32>
    %c0_8 = arith.constant 0 : index
    %c0_9 = arith.constant 0 : index
    %25 = vector.load %arg2[%c0_8, %c0_9] : memref<8x128xf32, #tpu.memory_space<vmem>>, vector<8x128xf32>
    tpu.vector_store %arg2[%c0_8, %c0_9], %24 {strides = array<i32>} : memref<8x128xf32, #tpu.memory_space<vmem>>, vector<8x128xf32>,
    return
  }
}

</mosaic_0001>

<llo_original>
// kernel: tpu_custom_call.1
$region0: #{tpu_custom_call.1}
  #allocation0 [shape = 'u32[]', space=smem, size = 0x4, offset = 0x4, fixed_abs, tag = 'smem constant byte address 0x4 - core index']
  #allocation1 [shape = 'u32[72,128]{1,0:T(1,128)}', space=vmem, size = 0x9000, scoped, tag = 'internal scratch']
  %s0 = inlined_call_operand.hbm [shape: s32[8], index: 0, kind: input, shape index: {}]
  %s1 = inlined_call_operand.hbm [shape: f32[513,128], index: 1, kind: input, shape index: {}]
  %s2 = inlined_call_operand.hbm [shape: f32[8,128], index: 2, kind: output, shape index: {}]
  %s3 = sld [smem:[#allocation0]]
  $region26: #{tpu_custom_call.1} parent=0
    _
  %s5 = ssub.s32 1, %s3
  %s6 = scalar_select 0, %s5, %s3
  $region1: #{tpu_custom_call.1} parent=0
    #allocation2 [shape = 'u8[512]{0}', space=smem, size = 0x200, scoped, tag = 'input window, operand 0, single buffered']
    #allocation3 [shape = 's32[1]{0}', space=sflag, size = 0x4, scoped, tag = 'scoped memory for tpu_custom_call.1']
    #allocation4 [shape = 's32[1]{0}', space=sflag, size = 0x4, scoped, tag = 'scoped memory for tpu_custom_call.1']
    #allocation5 [shape = 's32[1]{0}', space=sflag, size = 0x4, scoped, tag = 'scoped memory for tpu_custom_call.1']
    #allocation6 [shape = 'u8[266240]{0}', space=vmem, size = 0x41000, scoped, tag = 'input window, operand 1, single buffered']
    #allocation7 [shape = 'u8[4096]{0}', space=vmem, size = 0x1000, scoped, tag = 'output window, operand 0, single buffered']
    %7 = vsyncpa [#allocation5], 0
    %8 = vsyncpa [#allocation3], 0
    %9 = vsyncpa [#allocation4], 0
    // Predicated region
    $region2: #{tpu_custom_call.1} parent=1 // pred_check
      _
    $region3: #{tpu_custom_call.1} parent=1 // pred_check_branch
      %11 = sbr.rel (0) target = $region5
    $region4: #{tpu_custom_call.1} parent=1 // pred_region
      %13 = vsyncadd [#allocation5], 0
      %s15 = sshll.u32 %s0, 4
      %s16 = int_to_ptr.hbm [resolvable:$true] %s15
      %18 = dma.hbm_to_smem %s16, 16, [#allocation2], [#allocation5]
    $region5: #{tpu_custom_call.1} parent=1 // pred_fallthru
      _
    // Predicated region
    $region6: #{tpu_custom_call.1} parent=1 // pred_check
      _
    $region7: #{tpu_custom_call.1} parent=1 // pred_check_branch
      %20 = sbr.rel (0) target = $region9
    $region8: #{tpu_custom_call.1} parent=1 // pred_region
      %22 = vsyncadd [#allocation3], 0
      %s23 = sshll.u32 %s1, 4
      %s24 = int_to_ptr.hbm [resolvable:$true] %s23
      %s25 = sshll.u32 [#allocation6], 4
      %s26 = int_to_ptr.vmem [resolvable:$true] %s25
      %31 = dma.hbm_to_vmem [thread:$0]  %s24, 8320, %s26, [#allocation3], 128, 128, 8
    $region9: #{tpu_custom_call.1} parent=1 // pred_fallthru
      _
    // Predicated region
    $region10: #{tpu_custom_call.1} parent=1 // pred_check
      _
    $region11: #{tpu_custom_call.1} parent=1 // pred_check_branch
      %33 = sbr.rel (0) target = $region13
    $region12: #{tpu_custom_call.1} parent=1 // pred_region
      %35 = dma.done [#allocation5], 16
    $region13: #{tpu_custom_call.1} parent=1 // pred_fallthru
      _
    // Predicated region
    $region14: #{tpu_custom_call.1} parent=1 // pred_check
      _
    $region15: #{tpu_custom_call.1} parent=1 // pred_check_branch
      %37 = sbr.rel (0) target = $region17
    $region16: #{tpu_custom_call.1} parent=1 // pred_region
      %39 = dma.done [#allocation3], 8320
    $region17: #{tpu_custom_call.1} parent=1 // pred_fallthru
      _
    %40 = sfence
    %s41 = sld [smem:[#allocation2]]
    %s42 = scalar_lea.vmem [#allocation6], %s41
    %v43 = vld [vmem:[%s42] sm:$0x1]
    %s44 = sld [smem:[#allocation2 + $0x1]]
    %s45 = scalar_lea.vmem [#allocation6], %s44
    %v46 = vld [vmem:[%s45] sm:$0x1]
    %s47 = sld [smem:[#allocation2 + $0x2]]
    %s48 = scalar_lea.vmem [#allocation6], %s47
    %v49 = vld [vmem:[%s48] sm:$0x1]
    %s50 = sld [smem:[#allocation2 + $0x3]]
    %s51 = scalar_lea.vmem [#allocation6], %s50
    %v52 = vld [vmem:[%s51] sm:$0x1]
    %s53 = sld [smem:[#allocation2 + $0x4]]
    %s54 = scalar_lea.vmem [#allocation6], %s53
    %v55 = vld [vmem:[%s54] sm:$0x1]
    %s56 = sld [smem:[#allocation2 + $0x5]]
    %s57 = scalar_lea.vmem [#allocation6], %s56
    %v58 = vld [vmem:[%s57] sm:$0x1]
    %s59 = sld [smem:[#allocation2 + $0x6]]
    %s60 = scalar_lea.vmem [#allocation6], %s59
    %v61 = vld [vmem:[%s60] sm:$0x1]
    %s62 = sld [smem:[#allocation2 + $0x7]]
    %s63 = scalar_lea.vmem [#allocation6], %s62
    %v64 = vld [vmem:[%s63] sm:$0x1]
    %v66 = vrot.slane %v46, 7
    %v69 = vrot.slane %v49, 6
    %v72 = vrot.slane %v52, 5
    %v75 = vrot.slane %v55, 4
    %v78 = vrot.slane %v58, 3
    %v81 = vrot.slane %v61, 2
    %v84 = vrot.slane %v64, 1
    %vm86 = vcmask 1040384
    %v87 = vsel %vm86, %v43, %v66
    %vm88 = vcmask 1041408
    %v89 = vsel %vm88, %v87, %v69
    %vm90 = vcmask 1042432
    %v91 = vsel %vm90, %v89, %v72
    %vm92 = vcmask 1043456
    %v93 = vsel %vm92, %v91, %v75
    %vm94 = vcmask 1044480
    %v95 = vsel %vm94, %v93, %v78
    %vm96 = vcmask 1045504
    %v97 = vsel %vm96, %v95, %v81
    %vm98 = vcmask 1046528
    %v99 = vsel %vm98, %v97, %v84
    %100 = vst [vmem:[#allocation7] sm:$0xff] %v99
    // Predicated region
    $region18: #{tpu_custom_call.1} parent=1 // pred_check
      _
    $region19: #{tpu_custom_call.1} parent=1 // pred_check_branch
      %102 = sbr.rel (0) target = $region21
    $region20: #{tpu_custom_call.1} parent=1 // pred_region
      %104 = vsyncadd [#allocation4], 0
      %s106 = sshll.u32 [#allocation7], 4
      %s107 = int_to_ptr.vmem [resolvable:$true] %s106
      %s108 = sshll.u32 %s2, 4
      %s109 = int_to_ptr.hbm [resolvable:$true] %s108
      %111 = dma.vmem_to_hbm [thread:$0]  %s107, 128, %s109, [#allocation4]
    $region21: #{tpu_custom_call.1} parent=1 // pred_fallthru
      _
    // Predicated region
    $region22: #{tpu_custom_call.1} parent=1 // pred_check
      _
    $region23: #{tpu_custom_call.1} parent=1 // pred_check_branch
      %113 = sbr.rel (0) target = $region25
    $region24: #{tpu_custom_call.1} parent=1 // pred_region
      %115 = dma.done [#allocation4], 128
    $region25: #{tpu_custom_call.1} parent=1 // pred_fallthru
      _
    %116 = vsyncpa [#allocation3], 1
    %117 = vsyncpa [#allocation4], 1
    %118 = vsyncpa [#allocation5], 1

</llo_original>
